<compile_context>
chip_gen: v5e
topology: v5e:2x2
jax: 0.10.0
libtpu: 0.0.40
codegen_flags: <defaults>
</compile_context>

<pallas_src>
import jax
import jax.numpy as jnp
from jax.experimental import pallas as pl
from jax.experimental.pallas import tpu as pltpu

_LANE = 128
# ~4 MiB per block; with in+out double-buffering (~16 MiB) this fits under the
# explicit 32 MiB scoped-VMEM limit on every generation (v5e/v6e/v7x).
_TARGET_BLOCK_BYTES = 4 * 1024 * 1024
_VMEM_LIMIT_BYTES = 32 * 1024 * 1024
# Aim for >= 4 blocks so v7x's two TensorCores each drive >= 2 DMA streams.
_MIN_BLOCKS = 4


def _sublane(dtype) -> int:
    """Packed sublane count for the dtype: 8 (32-bit), 16 (16-bit), 32 (8-bit)."""
    itemsize = jnp.dtype(dtype).itemsize
    return max(8, 32 // max(1, itemsize))


def _copy_kernel(x_ref, o_ref):
    # Pure pass-through of the current lane-dense tile.
    o_ref[...] = x_ref[...]


def dummy_transformer_block(x: jax.Array, *, use_pallas: bool = False) -> jax.Array:
    """Identity forward of DummyTransformerBlock.

    Default (and fastest) path: return x — zero HBM traffic.
    With use_pallas=True, a lane-dense tiled Pallas copy kernel is used
    instead (fusion anchor / roofline-copy demonstration only).
    """
    if not use_pallas:
        return x
    return _identity_pallas_copy(x)


def _identity_pallas_copy(x: jax.Array) -> jax.Array:
    orig_shape = x.shape
    dtype = x.dtype
    n = x.size
    if n == 0:
        return x

    itemsize = jnp.dtype(dtype).itemsize
    sub = _sublane(dtype)

    # Widest lane-dense minor dim (multiple of 128) that divides n, if any.
    cols = None
    for c in (2048, 1024, 512, 256, 128):
        if n % c == 0:
            cols = c
            break

    padded = False
    if cols is None:
        # Odd total size: flatten, pad in the wrapper to a (sub x 128)-dense
        # rectangle, run the same tiled copy, slice the result back.
        cols = _LANE
        rows = pl.cdiv(n, cols)
        rows = ((rows + sub - 1) // sub) * sub
        pad = rows * cols - n
        x2 = jnp.pad(x.reshape(-1), (0, pad)).reshape(rows, cols)
        padded = True
    else:
        rows = n // cols
        x2 = x.reshape(rows, cols)

    # Largest row-block (multiple of the packed sublane count) under the
    # per-block byte budget.
    max_block_rows = max(sub, _TARGET_BLOCK_BYTES // (cols * itemsize))
    max_block_rows = max(sub, (max_block_rows // sub) * sub)

    # Keep the grid >= _MIN_BLOCKS when the row count allows it, so the
    # parallel axis can be split across TensorCores (v7x megacore).
    if rows // sub >= _MIN_BLOCKS:
        cap = max(sub, ((rows // _MIN_BLOCKS) // sub) * sub)
        max_block_rows = min(max_block_rows, cap)

    block_rows = min(rows, max_block_rows)
    grid = (pl.cdiv(rows, block_rows),)

    cost = pl.CostEstimate(flops=0, transcendentals=0,
                           bytes_accessed=2 * n * itemsize)

    y2 = pl.pallas_call(
        _copy_kernel,
        out_shape=jax.ShapeDtypeStruct((rows, cols), dtype),
        grid=grid,
        in_specs=[pl.BlockSpec((block_rows, cols), lambda i: (i, 0))],
        out_specs=pl.BlockSpec((block_rows, cols), lambda i: (i, 0)),
        compiler_params=pltpu.CompilerParams(
            dimension_semantics=("parallel",),
            vmem_limit_bytes=_VMEM_LIMIT_BYTES,
        ),
        cost_estimate=cost,
    )(x2)

    if padded:
        return y2.reshape(-1)[:n].reshape(orig_shape)
    return y2.reshape(orig_shape)


if __name__ == "__main__":
    # DummyTransformerBlock.__init__ creates no parameters; forward is identity.
    key = jax.random.PRNGKey(0)
    batch, seq, emb = 2, 8, 32
    x = jax.random.normal(key, (batch, seq, emb), dtype=jnp.float32)

    # Default zero-copy path (the recommended way to run an identity block).
    y0 = dummy_transformer_block(x)
    jax.block_until_ready(y0)
    assert y0.shape == x.shape and y0.dtype == x.dtype
    assert bool(jnp.all(y0 == x))

    # Opt-in Pallas path: lane-dense tiled copy.
    y1 = dummy_transformer_block(x, use_pallas=True)
    jax.block_until_ready(y1)
    assert y1.shape == x.shape and y1.dtype == x.dtype
    assert bool(jnp.all(y1 == x))

    # Odd-sized fallback (flatten + pad + tiled copy + slice).
    x_odd = jax.random.normal(jax.random.PRNGKey(0), (3, 5, 7), dtype=jnp.float32)
    y_odd = dummy_transformer_block(x_odd, use_pallas=True)
    jax.block_until_ready(y_odd)
    assert y_odd.shape == x_odd.shape and y_odd.dtype == x_odd.dtype
    assert bool(jnp.all(y_odd == x_odd))

    print("KERNEL_OK")
</pallas_src>

<mosaic_0001>
module attributes {stable_mosaic.version = 11 : i64} {
  func.func @_copy_kernel(%arg0: i32, %arg1: memref<1x512xf32, #tpu.memory_space<vmem>>, %arg2: memref<1x512xf32, #tpu.memory_space<vmem>>) attributes {dimension_semantics = [#tpu.dimension_semantics<parallel>], iteration_bounds = array<i64: 1>, scalar_prefetch = 0 : i64, scratch_operands = 0 : i64, tpu.core_type = #tpu.core_type<tc>, window_params = [{transform_indices = @transform_0, window_bounds = array<i64: 1, 512>}, {transform_indices = @transform_1, window_bounds = array<i64: 1, 512>}]} {
    %c0 = arith.constant 0 : index
    %c0_0 = arith.constant 0 : index
    %0 = vector.load %arg1[%c0, %c0_0] : memref<1x512xf32, #tpu.memory_space<vmem>>, vector<1x512xf32>
    %c0_1 = arith.constant 0 : index
    %c0_2 = arith.constant 0 : index
    %1 = vector.load %arg2[%c0_1, %c0_2] : memref<1x512xf32, #tpu.memory_space<vmem>>, vector<1x512xf32>
    tpu.vector_store %arg2[%c0_1, %c0_2], %0 {strides = array<i32>} : memref<1x512xf32, #tpu.memory_space<vmem>>, vector<1x512xf32>,
    return
  }
  func.func @transform_0(%arg0: i32) -> (i32, i32) {
    %c0_i32 = arith.constant 0 : i32
    %c0_i32_0 = arith.constant 0 : i32
    return %arg0, %c0_i32 : i32, i32
  }
  func.func @transform_1(%arg0: i32) -> (i32, i32) {
    %c0_i32 = arith.constant 0 : i32
    %c0_i32_0 = arith.constant 0 : i32
    return %arg0, %c0_i32 : i32, i32
  }
}

</mosaic_0001>

<llo_original>
// kernel: tpu_custom_call.1
$region0: #{tpu_custom_call.1}
  #allocation0 [shape = 'u32[]', space=smem, size = 0x4, offset = 0x4, fixed_abs, tag = 'smem constant byte address 0x4 - core index']
  #allocation1 [shape = 'u32[72,128]{1,0:T(1,128)}', space=vmem, size = 0x9000, scoped, tag = 'internal scratch']
  %s0 = inlined_call_operand.hbm [shape: f32[1,512], index: 0, kind: input, shape index: {}]
  %s1 = inlined_call_operand.hbm [shape: f32[1,512], index: 1, kind: output, shape index: {}]
  %s2 = sld [smem:[#allocation0]]
  $region18: #{tpu_custom_call.1} parent=0
    _
  %s4 = ssub.s32 1, %s2
  %s5 = scalar_select 0, %s4, %s2
  $region1: #{tpu_custom_call.1} parent=0
    #allocation2 [shape = 'u8[2048]{0}', space=vmem, size = 0x800, scoped, tag = 'input window, operand 0, single buffered']
    #allocation3 [shape = 's32[1]{0}', space=sflag, size = 0x4, scoped, tag = 'scoped memory for tpu_custom_call.1']
    #allocation4 [shape = 's32[1]{0}', space=sflag, size = 0x4, scoped, tag = 'scoped memory for tpu_custom_call.1']
    #allocation5 [shape = 'u8[2048]{0}', space=vmem, size = 0x800, scoped, tag = 'output window, operand 0, single buffered']
    %6 = vsyncpa [#allocation3], 0
    %7 = vsyncpa [#allocation4], 0
    // Predicated region
    $region2: #{tpu_custom_call.1} parent=1 // pred_check
      _
    $region3: #{tpu_custom_call.1} parent=1 // pred_check_branch
      %9 = sbr.rel (0) target = $region5
    $region4: #{tpu_custom_call.1} parent=1 // pred_region
      %11 = vsyncadd [#allocation3], 0
      %s13 = sshll.u32 %s0, 4
      %s14 = int_to_ptr.hbm [resolvable:$true] %s13
      %s15 = sshll.u32 [#allocation2], 4
      %s16 = int_to_ptr.vmem [resolvable:$true] %s15
      %18 = dma.hbm_to_vmem [thread:$0]  %s14, 64, %s16, [#allocation3]
    $region5: #{tpu_custom_call.1} parent=1 // pred_fallthru
      _
    // Predicated region
    $region6: #{tpu_custom_call.1} parent=1 // pred_check
      _
    $region7: #{tpu_custom_call.1} parent=1 // pred_check_branch
      %20 = sbr.rel (0) target = $region9
    $region8: #{tpu_custom_call.1} parent=1 // pred_region
      %22 = dma.done [#allocation3], 64
    $region9: #{tpu_custom_call.1} parent=1 // pred_fallthru
      _
    %v23 = vld [vmem:[#allocation2] sm:$0xf]
    %v24 = vlaneseq
    %vm25 = vcmp.ge.s32.totalorder %v24, 0
    %vm26 = vcmp.lt.s32.totalorder %v24, 512
    %vm27 = vmand %vm25, %vm26
    %28 = vst.msk [vmem:[#allocation5] sm:$0xf] %vm27, %v23
    // Predicated region
    $region10: #{tpu_custom_call.1} parent=1 // pred_check
      _
    $region11: #{tpu_custom_call.1} parent=1 // pred_check_branch
      %30 = sbr.rel (0) target = $region13
    $region12: #{tpu_custom_call.1} parent=1 // pred_region
      %32 = vsyncadd [#allocation4], 0
      %s34 = sshll.u32 [#allocation5], 4
      %s35 = int_to_ptr.vmem [resolvable:$true] %s34
      %s36 = sshll.u32 %s1, 4
      %s37 = int_to_ptr.hbm [resolvable:$true] %s36
      %39 = dma.vmem_to_hbm [thread:$0]  %s35, 64, %s37, [#allocation4]
    $region13: #{tpu_custom_call.1} parent=1 // pred_fallthru
      _
    // Predicated region
    $region14: #{tpu_custom_call.1} parent=1 // pred_check
      _
    $region15: #{tpu_custom_call.1} parent=1 // pred_check_branch
      %41 = sbr.rel (0) target = $region17
    $region16: #{tpu_custom_call.1} parent=1 // pred_region
      %43 = dma.done [#allocation4], 64
    $region17: #{tpu_custom_call.1} parent=1 // pred_fallthru
      _
    %44 = vsyncpa [#allocation3], 1
    %45 = vsyncpa [#allocation4], 1

</llo_original>
